<compile_context>
chip_gen: v7x
topology: tpu7x:2x2x1
jax: 0.10.0
libtpu: 0.0.40
codegen_flags: <defaults>
</compile_context>

<pallas_src>
import functools

import jax
import jax.numpy as jnp
from jax import lax
from jax.experimental import pallas as pl
from jax.experimental.pallas import tpu as pltpu


_SS_CHUNK = 2048                          # lane-chunk granularity (multiple of 128)
_DIRECT_D_LIMIT = 4 * _SS_CHUNK           # below this, reduce/scale the whole slab
_TARGET_BLOCK_BYTES = 2 * 1024 * 1024     # ~2 MiB input slab per grid step


# --------------------------------------------------------------------------- #
# Small helpers
# --------------------------------------------------------------------------- #
def _round_up(x, m):
    return ((x + m - 1) // m) * m


def _round_down(x, m):
    return (x // m) * m


def _vmem_limits():
    """(scoped vmem limit to request, byte budget used for path selection)."""
    try:
        phys = int(pltpu.get_tpu_info().vmem_capacity_bytes)
    except Exception:
        phys = 64 * 1024 * 1024           # conservative: v7x has 64 MiB per TC
    vmem_limit = min(phys // 2, 64 * 1024 * 1024)   # 64 MiB v5e/v6e, 32 MiB v7x
    budget = (vmem_limit * 3) // 4                  # headroom for temporaries
    return vmem_limit, budget


def _row_chunks(D):
    """Static, 128-aligned lane chunks covering [0, D); at most 8 chunks."""
    n = min(8, pl.cdiv(D, _SS_CHUNK))
    ch = _round_up(pl.cdiv(D, n), 128)
    return [(s, min(ch, D - s)) for s in range(0, D, ch)]


# --------------------------------------------------------------------------- #
# Kernels
# --------------------------------------------------------------------------- #
def _flatten_norm_kernel(x_ref, o_ref):
    """Whole feature row per block: reduce + scale in one pass (1R + 1W)."""
    tb, D = x_ref.shape

    if D <= _DIRECT_D_LIMIT:
        xf = x_ref[...].astype(jnp.float32)
        ss = jnp.sum(xf * xf, axis=1, keepdims=True)            # (tb, 1) f32
        inv = 1.0 / jnp.maximum(jnp.sqrt(ss), 1e-12)
        o_ref[...] = (xf * inv).astype(o_ref.dtype)
        return

    # Large D: process the row in <= 8 static lane chunks so the f32
    # temporaries stay a fraction of the slab (keeps single-pass viable on
    # v7x's smaller VMEM, avoids a full f32 upcast slab for bf16 inputs).
    chunks = _row_chunks(D)
    ss = jnp.zeros((tb, 1), jnp.float32)
    for s, w in chunks:
        xs = x_ref[:, s:s + w].astype(jnp.float32)
        ss = ss + jnp.sum(xs * xs, axis=1, keepdims=True)
    inv = 1.0 / jnp.maximum(jnp.sqrt(ss), 1e-12)                 # (tb, 1) f32
    for s, w in chunks:
        xs = x_ref[:, s:s + w].astype(jnp.float32)
        o_ref[:, s:s + w] = (xs * inv).astype(o_ref.dtype)


def _inv_norm_kernel(D, x_ref, inv_ref):
    """Fallback pass 1: per-row sum of squares over D tiles -> inverse norm."""
    k = pl.program_id(1)

    @pl.when(k == 0)
    def _():
        inv_ref[...] = jnp.zeros_like(inv_ref)

    x = x_ref[...].astype(jnp.float32)
    td = x.shape[1]
    if D % td != 0:
        # Mask the ragged last D tile in-kernel (OOB lanes hold garbage)
        # instead of padding x in HBM.
        col = k * td + lax.broadcasted_iota(jnp.int32, x.shape, 1)
        x = jnp.where(col < D, x, 0.0)
    inv_ref[...] += jnp.sum(x * x, axis=1, keepdims=True)

    @pl.when(k == pl.num_programs(1) - 1)
    def _():
        inv_ref[...] = 1.0 / jnp.maximum(jnp.sqrt(inv_ref[...]), 1e-12)


def _scale_kernel(x_ref, inv_ref, o_ref):
    """Fallback pass 2: broadcast-multiply each D tile by the inverse norm."""
    xf = x_ref[...].astype(jnp.float32)
    o_ref[...] = (xf * inv_ref[...]).astype(o_ref.dtype)


# --------------------------------------------------------------------------- #
# pallas_call wrappers
# --------------------------------------------------------------------------- #
def _flatten_norm_single_pass(x, tb, vmem_limit):
    B, D = x.shape
    grid = (pl.cdiv(B, tb),)
    return pl.pallas_call(
        _flatten_norm_kernel,
        out_shape=jax.ShapeDtypeStruct((B, D), x.dtype),
        grid=grid,
        in_specs=[pl.BlockSpec((tb, D), lambda i: (i, 0))],
        out_specs=pl.BlockSpec((tb, D), lambda i: (i, 0)),
        compiler_params=pltpu.CompilerParams(
            dimension_semantics=("parallel",),
            vmem_limit_bytes=vmem_limit,
        ),
    )(x)


def _flatten_norm_two_pass(x, tb, td, vmem_limit):
    B, D = x.shape
    grid = (pl.cdiv(B, tb), pl.cdiv(D, td))

    inv = pl.pallas_call(
        functools.partial(_inv_norm_kernel, D),
        out_shape=jax.ShapeDtypeStruct((B, 1), jnp.float32),
        grid=grid,
        in_specs=[pl.BlockSpec((tb, td), lambda i, k: (i, k))],
        out_specs=pl.BlockSpec((tb, 1), lambda i, k: (i, 0)),
        compiler_params=pltpu.CompilerParams(
            dimension_semantics=("parallel", "arbitrary"),
            vmem_limit_bytes=vmem_limit,
        ),
    )(x)

    return pl.pallas_call(
        _scale_kernel,
        out_shape=jax.ShapeDtypeStruct((B, D), x.dtype),
        grid=grid,
        in_specs=[pl.BlockSpec((tb, td), lambda i, k: (i, k)),
                  pl.BlockSpec((tb, 1), lambda i, k: (i, 0))],
        out_specs=pl.BlockSpec((tb, td), lambda i, k: (i, k)),
        compiler_params=pltpu.CompilerParams(
            dimension_semantics=("parallel", "parallel"),
            vmem_limit_bytes=vmem_limit,
        ),
    )(x, inv)


def flatten_norm(x):
    """Equivalent of FlattenNorm.forward for an arbitrary-rank (>=2D) input."""
    if x.ndim > 2:
        x = x.reshape(x.shape[0], -1)     # flatten(1): metadata-only reshape
    B, D = x.shape
    isz = jnp.dtype(x.dtype).itemsize
    vmem_limit, budget = _vmem_limits()

    # Live VMEM of the single-pass path at the minimum (8-row) tile:
    # double-buffered input + output blocks plus small chunked f32 temps.
    tb_min = B if B < 8 else 8
    single_pass_bytes = tb_min * D * (4 * isz + 1) + (1 << 20)

    if single_pass_bytes <= budget:
        if B <= 8:
            # TODO(synk): on v7x a single grid step leaves one TensorCore idle
            # for small-B / large-D shapes; splitting D across the two cores
            # would recover up to ~2x HBM bandwidth there.
            tb = B
        else:
            tb = max(8, _TARGET_BLOCK_BYTES // max(D * isz, 1))
            tb = _round_down(tb, 8)
            # Keep >= ~4 grid steps so DMA-in / compute / DMA-out pipeline and
            # the batch axis can shard across both v7x TensorCores.
            tb = min(tb, max(8, _round_up(pl.cdiv(B, 4), 8)))
            tb = min(tb, _round_down(B, 8))
        return _flatten_norm_single_pass(x, tb, vmem_limit)

    # Rows too large for VMEM: two passes over x (2R + 1W), D-tiled, no padding.
    tb = tb_min
    td = _TARGET_BLOCK_BYTES // max(tb * isz, 1)
    td = max(128, _round_down(td, 128))
    td = min(td, max(128, _round_down(D, 128)))
    return _flatten_norm_two_pass(x, tb, td, vmem_limit)


# --------------------------------------------------------------------------- #
# Self-test
# --------------------------------------------------------------------------- #
if __name__ == "__main__":
    def _ref(x):
        xf = x.reshape(x.shape[0], -1).astype(jnp.float32)
        n = jnp.maximum(jnp.sqrt(jnp.sum(xf * xf, axis=1, keepdims=True)), 1e-12)
        return (xf / n).astype(x.dtype)

    key = jax.random.PRNGKey(0)
    k1, k2, k3, k4 = jax.random.split(key, 4)

    # 1) NCHW conv feature map -> D=1024, single-pass direct path.
    x1 = jax.random.normal(k1, (2, 4, 16, 16), dtype=jnp.float32)
    y1 = jax.block_until_ready(flatten_norm(x1))
    assert y1.shape == (2, 1024)
    assert jnp.allclose(y1, _ref(x1), atol=1e-5, rtol=1e-5)

    # 2) Feature dim not a multiple of 128 (ragged lane tail, no padding/slice).
    x2 = jax.random.normal(k2, (3, 5, 6, 7), dtype=jnp.float32)
    y2 = jax.block_until_ready(flatten_norm(x2))
    assert y2.shape == (3, 210)
    assert jnp.allclose(y2, _ref(x2), atol=1e-5, rtol=1e-5)

    # 3) Chunked in-kernel reduction (D > 8192) + ragged batch (B % tb != 0).
    x3 = jax.random.normal(k3, (13, 8200), dtype=jnp.float32)
    y3 = jax.block_until_ready(flatten_norm(x3))
    assert y3.shape == (13, 8200)
    assert jnp.allclose(y3, _ref(x3), atol=1e-5, rtol=1e-5)

    # 4) Two-pass fallback exercised directly at a small shape
    #    (ragged batch + ragged last D tile, masked in-kernel).
    x4 = jax.random.normal(k4, (10, 1000), dtype=jnp.float32)
    vmem_limit, _ = _vmem_limits()
    y4 = jax.block_until_ready(
        _flatten_norm_two_pass(x4, tb=8, td=384, vmem_limit=vmem_limit))
    assert y4.shape == (10, 1000)
    assert jnp.allclose(y4, _ref(x4), atol=1e-5, rtol=1e-5)

    print("KERNEL_OK")
</pallas_src>

<mosaic_0001>
module attributes {stable_mosaic.version = 11 : i64} {
  func.func @_flatten_norm_kernel(%arg0: i32, %arg1: memref<2x1024xf32, #tpu.memory_space<vmem>>, %arg2: memref<2x1024xf32, #tpu.memory_space<vmem>>) attributes {dimension_semantics = [#tpu.dimension_semantics<parallel>], iteration_bounds = array<i64: 1>, scalar_prefetch = 0 : i64, scratch_operands = 0 : i64, tpu.core_type = #tpu.core_type<tc>, window_params = [{transform_indices = @transform_0, window_bounds = array<i64: 2, 1024>}, {transform_indices = @transform_1, window_bounds = array<i64: 2, 1024>}]} {
    %c0 = arith.constant 0 : index
    %c0_0 = arith.constant 0 : index
    %0 = vector.load %arg1[%c0, %c0_0] : memref<2x1024xf32, #tpu.memory_space<vmem>>, vector<2x1024xf32>
    %1 = arith.mulf %0, %0 : vector<2x1024xf32>
    %cst = arith.constant dense<0.000000e+00> : vector<2xf32>
    %2 = vector.multi_reduction <add>, %1, %cst [1] : vector<2x1024xf32> to vector<2xf32>
    %3 = vector.shape_cast %2 : vector<2xf32> to vector<2x1xf32>
    %4 = math.sqrt %3 : vector<2x1xf32>
    %cst_1 = arith.constant 9.99999996E-13 : f32
    %5 = vector.broadcast %cst_1 : f32 to vector<2x1xf32>
    %6 = arith.maximumf %4, %5 : vector<2x1xf32>
    %cst_2 = arith.constant 1.000000e+00 : f32
    %7 = vector.broadcast %cst_2 : f32 to vector<2x1xf32>
    %8 = arith.divf %7, %6 : vector<2x1xf32>
    %9 = vector.broadcast %8 : vector<2x1xf32> to vector<2x1024xf32>
    %10 = arith.mulf %0, %9 : vector<2x1024xf32>
    %c0_3 = arith.constant 0 : index
    %c0_4 = arith.constant 0 : index
    %11 = vector.load %arg2[%c0_3, %c0_4] : memref<2x1024xf32, #tpu.memory_space<vmem>>, vector<2x1024xf32>
    tpu.vector_store %arg2[%c0_3, %c0_4], %10 {strides = array<i32>} : memref<2x1024xf32, #tpu.memory_space<vmem>>, vector<2x1024xf32>,
    return
  }
  func.func @transform_0(%arg0: i32) -> (i32, i32) {
    %c0_i32 = arith.constant 0 : i32
    %c0_i32_0 = arith.constant 0 : i32
    return %arg0, %c0_i32 : i32, i32
  }
  func.func @transform_1(%arg0: i32) -> (i32, i32) {
    %c0_i32 = arith.constant 0 : i32
    %c0_i32_0 = arith.constant 0 : i32
    return %arg0, %c0_i32 : i32, i32
  }
}

</mosaic_0001>

<llo_original>
// kernel: tpu_custom_call.1
$region0: #{tpu_custom_call.1}
  #allocation0 [shape = 'u32[]', space=smem, size = 0x4, offset = 0x4, fixed_abs, tag = 'smem constant byte address 0x4 - core index']
  #allocation1 [shape = 'u32[144,128]{1,0:T(1,128)}', space=vmem, size = 0x12000, scoped, tag = 'internal scratch']
  %s0 = inlined_call_operand.hbm [shape: f32[2,1024], index: 0, kind: input, shape index: {}]
  %s1 = inlined_call_operand.hbm [shape: f32[2,1024], index: 1, kind: output, shape index: {}]
  %s2 = sld [smem:[#allocation0]]
  $region18: #{tpu_custom_call.1} parent=0
    _
  %s4 = ssub.s32 1, %s2
  %s5 = scalar_select 0, %s4, %s2
  $region1: #{tpu_custom_call.1} parent=0
    #allocation2 [shape = 'u8[8192]{0}', space=vmem, size = 0x2000, scoped, tag = 'input window, operand 0, single buffered']
    #allocation3 [shape = 's32[1]{0}', space=sflag, size = 0x4, scoped, tag = 'scoped memory for tpu_custom_call.1']
    #allocation4 [shape = 's32[1]{0}', space=sflag, size = 0x4, scoped, tag = 'scoped memory for tpu_custom_call.1']
    #allocation5 [shape = 'u8[8192]{0}', space=vmem, size = 0x2000, scoped, tag = 'output window, operand 0, single buffered']
    %6 = vsyncpa [#allocation3], 0
    %7 = vsyncpa [#allocation4], 0
    // Predicated region
    $region2: #{tpu_custom_call.1} parent=1 // pred_check
      _
    $region3: #{tpu_custom_call.1} parent=1 // pred_check_branch
      %9 = sbr.rel (0) target = $region5
    $region4: #{tpu_custom_call.1} parent=1 // pred_region
      %s11 = ssub.s32 256, 256
      %12 = vsyncadd [#allocation3], %s11
      %s14 = sshll.u32 [#allocation2], 4
      %s15 = int_to_ptr.vmem [resolvable:$true] %s14
      %17 = dma.hbm_to_vmem [thread:$0]  %s0, 256, %s15, [#allocation3]
    $region5: #{tpu_custom_call.1} parent=1 // pred_fallthru
      _
    // Predicated region
    $region6: #{tpu_custom_call.1} parent=1 // pred_check
      _
    $region7: #{tpu_custom_call.1} parent=1 // pred_check_branch
      %19 = sbr.rel (0) target = $region9
    $region8: #{tpu_custom_call.1} parent=1 // pred_region
      %20 = dma.done [#allocation3], 256
    $region9: #{tpu_custom_call.1} parent=1 // pred_fallthru
      _
    %v21 = vld [vmem:[#allocation2] sm:$0xff]
    %v22 = vld [vmem:[#allocation2 + $0x8] sm:$0xff]
    %v23 = vmul.f32 %v21, %v21
    %v24 = vmul.f32 %v22, %v22
    %v27 = vcombine.high %v23, %v23
    %v29 = vunpack.c.l.s4 1983009808
    %v30 = vunpack.c.0.s8 %v29
    %v31 = vlaneseq
    %v32 = vshrl.u32 %v31, 7
    %v33 = vsub.s32 %v30, %v32
    %v34 = vrot.slane %v23, %v33
    %v36 = vunpack.c.l.s4 1983009808
    %v37 = vunpack.c.0.s8 %v36
    %v38 = vlaneseq
    %v39 = vshrl.u32 %v38, 7
    %v40 = vsub.s32 %v37, %v39
    %v41 = vrot.slane %v27, %v40
    %v42 = vcombine.high %v34, %v34
    %v43 = vcombine.high %v41, %v41
    %v44 = vcombine.high %v24, %v24
    %v46 = vunpack.c.l.s4 1983009808
    %v47 = vunpack.c.0.s8 %v46
    %v48 = vlaneseq
    %v49 = vshrl.u32 %v48, 7
    %v50 = vsub.s32 %v47, %v49
    %v51 = vrot.slane %v24, %v50
    %v53 = vunpack.c.l.s4 1983009808
    %v54 = vunpack.c.0.s8 %v53
    %v55 = vlaneseq
    %v56 = vshrl.u32 %v55, 7
    %v57 = vsub.s32 %v54, %v56
    %v58 = vrot.slane %v44, %v57
    %v59 = vcombine.high %v51, %v51
    %v60 = vcombine.high %v58, %v58
    %vm69 = vcmask 1041408
    %v70 = vsel %vm69, %v34, 0.0
    %v71 = vsel %vm69, %v42, 0.0
    %v72 = vadd.f32 %v70, %v71
    %v73 = vsel %vm69, %v41, 0.0
    %v74 = vadd.f32 %v72, %v73
    %v75 = vsel %vm69, %v43, 0.0
    %v76 = vadd.f32 %v74, %v75
    %v77 = vsel %vm69, %v51, 0.0
    %v78 = vadd.f32 %v76, %v77
    %v79 = vsel %vm69, %v59, 0.0
    %v80 = vadd.f32 %v78, %v79
    %v81 = vsel %vm69, %v58, 0.0
    %v82 = vadd.f32 %v80, %v81
    %v83 = vsel %vm69, %v60, 0.0
    %v84 = vadd.f32 %v82, %v83
    %85 = vadd.xlane.f32.xlu0 %v84
    %v86 = vpop.xlane.xlu0 %85
    %v87 = vrsqrt.pop %v86
    %v88 = vmul.f32 %v86, %v87
    %vm89 = vcmp.eq.f32.partialorder %v86, inf
    %v90 = vsel %vm89, %v86, %v88
    %vm91 = vcmp.eq.f32.partialorder %v86, 0.0
    %v92 = vand.u32 %v86, 2147483648
    %v93 = vsel %vm91, %v92, %v90
    %v94 = vmax.f32 %v93, 1e-12
    %v95 = vrcp.pop %v94
    %v96 = vmul.f32 1.0, %v95
    %v99 = vunpack.c.l.s4 269488144
    %v100 = vunpack.c.0.s8 %v99
    %v101 = vlaneseq
    %v102 = vshrl.u32 %v101, 7
    %v103 = vsub.s32 %v100, %v102
    %v104 = vrot.slane %v96, %v103
    %v106 = vmul.f32 %v21, %v104
    %v107 = vmul.f32 %v22, %v104
    %108 = vst [vmem:[#allocation5] sm:$0xff] %v106
    %109 = vst [vmem:[#allocation5 + $0x8] sm:$0xff] %v107
    // Predicated region
    $region10: #{tpu_custom_call.1} parent=1 // pred_check
      _
    $region11: #{tpu_custom_call.1} parent=1 // pred_check_branch
      %111 = sbr.rel (0) target = $region13
    $region12: #{tpu_custom_call.1} parent=1 // pred_region
      %s113 = ssub.s32 256, 256
      %114 = vsyncadd [#allocation4], %s113
      %s116 = sshll.u32 [#allocation5], 4
      %s117 = int_to_ptr.vmem [resolvable:$true] %s116
      %119 = dma.vmem_to_hbm [thread:$0]  %s117, 256, %s1, [#allocation4]
    $region13: #{tpu_custom_call.1} parent=1 // pred_fallthru
      _
    // Predicated region
    $region14: #{tpu_custom_call.1} parent=1 // pred_check
      _
    $region15: #{tpu_custom_call.1} parent=1 // pred_check_branch
      %121 = sbr.rel (0) target = $region17
    $region16: #{tpu_custom_call.1} parent=1 // pred_region
      %122 = dma.done [#allocation4], 256
    $region17: #{tpu_custom_call.1} parent=1 // pred_fallthru
      _
    %123 = vsyncpa [#allocation3], 1
    %124 = vsyncpa [#allocation4], 1

</llo_original>
